<compile_context>
chip_gen: v6e
topology: v6e:2x2x1
jax: 0.10.0
libtpu: 0.0.40
codegen_flags: <defaults>
</compile_context>

<pallas_src>
import jax
import jax.numpy as jnp
from jax import lax
from jax.experimental import pallas as pl
from jax.experimental.pallas import tpu as pltpu


# ---------------------------------------------------------------------------
# Shared bias-free conv helper: unit-output-stride conv in NCL layout.
# Returns (tile_n, C_out, L_full) f32.
# ---------------------------------------------------------------------------
def _make_conv_full(C_in, C_out, K, dilation, L_full, use_mxu):
    if not use_mxu:
        # L-on-lanes VPU formulation: K*C_in broadcast multiply-accumulates.
        # w_all: (K*C_in, C_out, 1) -- C_out pre-placed on sublanes (no relayout).
        def conv_full(x, w_all):
            tile_n = x.shape[0]
            y = jnp.zeros((tile_n, C_out, L_full), jnp.float32)
            for k in range(K):
                for ci in range(C_in):
                    xs = x[:, ci:ci + 1, k * dilation:k * dilation + L_full]   # (tile_n,1,L_full)
                    w_col = w_all[k * C_in + ci]                               # (C_out, 1)
                    y = y + w_col[None, :, :] * xs
            return y
    else:
        # MXU fallback for larger channel counts. w_all: (K, C_in, C_out).
        # TODO(synk): switch to bf16 matmul inputs (f32 accumulate) on v6e/v7x.
        def conv_full(x, w_all):
            tile_n = x.shape[0]
            acc = jnp.zeros((tile_n * L_full, C_out), jnp.float32)
            for k in range(K):
                xk = x[:, :, k * dilation:k * dilation + L_full]               # (tile_n,C_in,L_full)
                xk_t = jnp.swapaxes(xk, 1, 2).reshape(tile_n * L_full, C_in)
                acc = acc + jnp.dot(xk_t, w_all[k], preferred_element_type=jnp.float32)
            return jnp.swapaxes(acc.reshape(tile_n, L_full, C_out), 1, 2)
    return conv_full


# ---------------------------------------------------------------------------
# Pass 1: conv + partial BN statistics (sum, sum of squares) per batch tile.
# ---------------------------------------------------------------------------
def _make_stats_kernel(conv_full, C_out, stride, L_out, L_full):
    def kernel(x_ref, w_ref, stats_ref):
        y = conv_full(x_ref[...], w_ref[...])                      # (tile_n, C_out, L_full)
        if stride > 1:
            # only the stride-strided conv positions are real Conv1d outputs
            pos = lax.broadcasted_iota(jnp.int32, (1, L_full), 1)
            valid = ((pos % stride) == 0) & ((pos // stride) < L_out)
            y = y * valid.astype(jnp.float32)[None]
        # TODO(synk): E[x^2]-E[x]^2 is cancellation-prone for large-mean activations;
        # a Welford-style combine would be more robust.
        ys = jnp.sum(y, axis=0)                                    # (C_out, L_full)
        yss = jnp.sum(y * y, axis=0)                               # (C_out, L_full)
        s = jnp.sum(ys, axis=1, keepdims=True)                     # (C_out, 1)
        ss = jnp.sum(yss, axis=1, keepdims=True)                   # (C_out, 1)
        stats_ref[...] = jnp.concatenate([s, ss], axis=1)[None]    # (1, C_out, 2)
    return kernel


# ---------------------------------------------------------------------------
# Pass 2: BN scale/shift (from global stats) + conv recompute + ReLU + MaxPool.
# ---------------------------------------------------------------------------
def _make_fused_kernel(conv_full, C_out, stride, pool_k, pool_s,
                       L_full, L_pool, inv_count, eps):
    hop = stride * pool_s
    Lm = (L_pool - 1) * hop + 1

    def kernel(x_ref, w_ref, stats_ref, gb_ref, o_ref):
        # per-channel constants from the global stats (tiny; recomputed every grid
        # step so it stays correct under megacore sharding of the parallel axis).
        tot = jnp.sum(stats_ref[...], axis=0)                      # (C_out, 2)
        mean = tot[:, 0:1] * inv_count                             # (C_out, 1)
        var = jnp.maximum(tot[:, 1:2] * inv_count - mean * mean, 0.0)
        gb = gb_ref[...]                                           # (C_out, 2)
        scale = gb[:, 0:1] * lax.rsqrt(var + eps)                  # (C_out, 1)
        shift = gb[:, 1:2] - mean * scale                          # (C_out, 1)

        y = conv_full(x_ref[...], w_ref[...])                      # (tile_n, C_out, L_full)
        ya = jnp.maximum(y * scale[None] + shift[None], 0.0)

        # MaxPool1d: (pool_k-1) shifted contiguous-slice maxima, then downsample
        # by `hop` via a 0/1 selection matmul (exact; avoids lane-strided slices).
        # TODO(synk): at large L a strided ref load would skip the selection matmul.
        m = ya[:, :, 0:Lm]
        for p in range(1, pool_k):
            m = jnp.maximum(m, ya[:, :, p * stride:p * stride + Lm])
        if hop == 1:
            pooled = m
        else:
            jj = lax.broadcasted_iota(jnp.int32, (Lm, L_pool), 0)
            ll = lax.broadcasted_iota(jnp.int32, (Lm, L_pool), 1)
            sel = (jj == ll * hop).astype(jnp.float32)
            tile_n = m.shape[0]
            m2 = m.reshape(tile_n * C_out, Lm)
            pooled = jnp.dot(m2, sel, preferred_element_type=jnp.float32)
            pooled = pooled.reshape(tile_n, C_out, L_pool)
        o_ref[...] = pooled.astype(o_ref.dtype)

    return kernel


def convblock_forward(x, weight, bias, gamma, beta, *,
                      padding=0, stride=1, dilation=1,
                      pool_k=2, pool_s=2, eps=1e-5):
    """x: (N, C_in, L) float32 (PyTorch Conv1d layout). Returns (N, C_out, L_pool)."""
    del bias  # per-channel constant cancels exactly under train-mode BatchNorm
    # TODO(synk): re-add the conv bias if this is reused with eval-mode running stats.

    N, C_in, L = x.shape
    C_out, _, K = weight.shape
    x = x.astype(jnp.float32)

    if padding:
        # TODO(synk): fold the length padding into the kernels to save one XLA pad.
        x = jnp.pad(x, ((0, 0), (0, 0), (padding, padding)))
        L = L + 2 * padding

    L_full = L - dilation * (K - 1)                         # unit-stride conv length
    L_out = (L - dilation * (K - 1) - 1) // stride + 1      # actual Conv1d output length
    L_pool = (L_out - pool_k) // pool_s + 1

    # ---- weight pre-arrangement (tiny, host side) ----
    use_mxu = (K * C_in) > 128
    w_t = jnp.transpose(weight, (2, 1, 0)).astype(jnp.float32)        # (K, C_in, C_out)
    if use_mxu:
        w_arr = w_t
    else:
        w_arr = w_t.reshape(K * C_in, C_out)[:, :, None]               # (K*C_in, C_out, 1)

    # ---- generation-aware tile sizing ----
    try:
        vmem_cap = int(pltpu.get_tpu_info().vmem_capacity_bytes)
    except Exception:
        vmem_cap = 64 * 1024 * 1024                # conservative (v7x per-TC)
    vmem_limit = max(min(vmem_cap // 2, 96 * 1024 * 1024), 16 * 1024 * 1024)
    step_budget = vmem_limit // 3                  # double-buffered blocks + live temps

    per_sample = 4 * (C_in * L + 3 * C_out * L_full + C_out * L_pool) + 1
    tile_n = max(1, step_budget // per_sample)
    tile_n = min(tile_n, N)
    if N >= 2:                                     # >= 2 grid steps: keep both v7x cores busy
        tile_n = min(tile_n, pl.cdiv(N, 2))
    n_tiles = pl.cdiv(N, tile_n)
    N_pad = n_tiles * tile_n
    if N_pad != N:                                 # zero samples contribute 0 to the stats
        x = jnp.pad(x, ((0, N_pad - N), (0, 0), (0, 0)))

    cparams = pltpu.CompilerParams(
        dimension_semantics=("parallel",),
        vmem_limit_bytes=vmem_limit,
    )

    conv_full = _make_conv_full(C_in, C_out, K, dilation, L_full, use_mxu)

    # -------------------- pass 1: conv + partial BN stats --------------------
    stats_kernel = _make_stats_kernel(conv_full, C_out, stride, L_out, L_full)
    stats = pl.pallas_call(
        stats_kernel,
        out_shape=jax.ShapeDtypeStruct((n_tiles, C_out, 2), jnp.float32),
        grid=(n_tiles,),
        in_specs=[pl.BlockSpec((tile_n, C_in, L), lambda i: (i, 0, 0)),
                  pl.BlockSpec(w_arr.shape, lambda i: (0, 0, 0))],
        out_specs=pl.BlockSpec((1, C_out, 2), lambda i: (i, 0, 0)),
        compiler_params=cparams,
    )(x, w_arr)

    # BN affine params stacked so pass 2 folds all per-channel math in-kernel.
    gb = jnp.stack([gamma.astype(jnp.float32), beta.astype(jnp.float32)], axis=1)  # (C_out, 2)
    inv_count = 1.0 / float(N * L_out)

    # ---------- pass 2: conv recompute + BN apply + ReLU + MaxPool -----------
    fused_kernel = _make_fused_kernel(conv_full, C_out, stride, pool_k, pool_s,
                                      L_full, L_pool, inv_count, eps)
    out = pl.pallas_call(
        fused_kernel,
        out_shape=jax.ShapeDtypeStruct((N_pad, C_out, L_pool), jnp.float32),
        grid=(n_tiles,),
        in_specs=[pl.BlockSpec((tile_n, C_in, L), lambda i: (i, 0, 0)),
                  pl.BlockSpec(w_arr.shape, lambda i: (0, 0, 0)),
                  pl.BlockSpec((n_tiles, C_out, 2), lambda i: (0, 0, 0)),
                  pl.BlockSpec((C_out, 2), lambda i: (0, 0))],
        out_specs=pl.BlockSpec((tile_n, C_out, L_pool), lambda i: (i, 0, 0)),
        compiler_params=cparams,
    )(x, w_arr, stats, gb)

    return out[:N]


def _reference(x, weight, bias, gamma, beta, pool_k=2, pool_s=2, eps=1e-5):
    """Pure-JAX reference of the PyTorch convblock forward (train-mode BN)."""
    y = lax.conv_general_dilated(x, weight, window_strides=(1,), padding='VALID',
                                 dimension_numbers=('NCH', 'OIH', 'NCH'))
    y = y + bias[None, :, None]
    mean = y.mean(axis=(0, 2), keepdims=True)
    var = ((y - mean) ** 2).mean(axis=(0, 2), keepdims=True)
    y = (y - mean) / jnp.sqrt(var + eps) * gamma[None, :, None] + beta[None, :, None]
    y = jnp.maximum(y, 0.0)
    L_out = y.shape[-1]
    L_pool = (L_out - pool_k) // pool_s + 1
    y = y[..., :L_pool * pool_s].reshape(y.shape[0], y.shape[1], L_pool, pool_s)
    return y.max(axis=-1)


if __name__ == "__main__":
    # Small shapes consistent with the module: N=2, C_in=4, L=16, C_out=8, K=2.
    N, C_in, C_out, L = 2, 4, 8, 16
    K = 2  # convkernel default

    key = jax.random.PRNGKey(0)
    kx, kw, kb = jax.random.split(key, 3)
    x = jax.random.normal(kx, (N, C_in, L), dtype=jnp.float32)
    weight = 0.1 * jax.random.normal(kw, (C_out, C_in, K), dtype=jnp.float32)
    bias = 0.1 * jax.random.normal(kb, (C_out,), dtype=jnp.float32)
    gamma = jnp.ones((C_out,), jnp.float32)   # BatchNorm1d init
    beta = jnp.zeros((C_out,), jnp.float32)

    out = convblock_forward(x, weight, bias, gamma, beta)
    out = jax.block_until_ready(out)

    ref = _reference(x, weight, bias, gamma, beta)
    assert out.shape == ref.shape, (out.shape, ref.shape)
    assert jnp.allclose(out, ref, atol=1e-4, rtol=1e-4), float(jnp.max(jnp.abs(out - ref)))

    print("KERNEL_OK")
</pallas_src>

<mosaic_0001>
module attributes {stable_mosaic.version = 11 : i64} {
  func.func @kernel(%arg0: i32, %arg1: memref<1x4x16xf32, #tpu.memory_space<vmem>>, %arg2: memref<8x8x1xf32, #tpu.memory_space<vmem>>, %arg3: memref<1x8x2xf32, #tpu.memory_space<vmem>>) attributes {dimension_semantics = [#tpu.dimension_semantics<parallel>], iteration_bounds = array<i64: 2>, scalar_prefetch = 0 : i64, scratch_operands = 0 : i64, tpu.core_type = #tpu.core_type<tc>, window_params = [{transform_indices = @transform_0, window_bounds = array<i64: 1, 4, 16>}, {pipeline_mode = #tpu.pipeline_mode<synchronous>, transform_indices = @transform_1, window_bounds = array<i64: 8, 8, 1>}, {transform_indices = @transform_2, window_bounds = array<i64: 1, 8, 2>}]} {
    %c0 = arith.constant 0 : index
    %c0_0 = arith.constant 0 : index
    %c0_1 = arith.constant 0 : index
    %0 = vector.load %arg1[%c0, %c0_0, %c0_1] : memref<1x4x16xf32, #tpu.memory_space<vmem>>, vector<1x4x16xf32>
    %c0_2 = arith.constant 0 : index
    %c0_3 = arith.constant 0 : index
    %c0_4 = arith.constant 0 : index
    %1 = vector.load %arg2[%c0_2, %c0_3, %c0_4] : memref<8x8x1xf32, #tpu.memory_space<vmem>>, vector<8x8x1xf32>
    %cst = arith.constant 0.000000e+00 : f32
    %2 = vector.broadcast %cst : f32 to vector<1x8x15xf32>
    %3 = vector.extract_strided_slice %0 {offsets = [0, 0, 0], sizes = [1, 1, 15], strides = [1, 1, 1]} : vector<1x4x16xf32> to vector<1x1x15xf32>
    %4 = vector.extract_strided_slice %1 {offsets = [0, 0, 0], sizes = [1, 8, 1], strides = [1, 1, 1]} : vector<8x8x1xf32> to vector<1x8x1xf32>
    %5 = vector.shape_cast %4 : vector<1x8x1xf32> to vector<8x1xf32>
    %6 = vector.shape_cast %5 : vector<8x1xf32> to vector<1x8x1xf32>
    %7 = vector.broadcast %6 : vector<1x8x1xf32> to vector<1x8x15xf32>
    %8 = vector.broadcast %3 : vector<1x1x15xf32> to vector<1x8x15xf32>
    %9 = arith.mulf %7, %8 : vector<1x8x15xf32>
    %10 = arith.addf %2, %9 : vector<1x8x15xf32>
    %11 = vector.extract_strided_slice %0 {offsets = [0, 1, 0], sizes = [1, 1, 15], strides = [1, 1, 1]} : vector<1x4x16xf32> to vector<1x1x15xf32>
    %12 = vector.extract_strided_slice %1 {offsets = [1, 0, 0], sizes = [1, 8, 1], strides = [1, 1, 1]} : vector<8x8x1xf32> to vector<1x8x1xf32>
    %13 = vector.shape_cast %12 : vector<1x8x1xf32> to vector<8x1xf32>
    %14 = vector.shape_cast %13 : vector<8x1xf32> to vector<1x8x1xf32>
    %15 = vector.broadcast %14 : vector<1x8x1xf32> to vector<1x8x15xf32>
    %16 = vector.broadcast %11 : vector<1x1x15xf32> to vector<1x8x15xf32>
    %17 = arith.mulf %15, %16 : vector<1x8x15xf32>
    %18 = arith.addf %10, %17 : vector<1x8x15xf32>
    %19 = vector.extract_strided_slice %0 {offsets = [0, 2, 0], sizes = [1, 1, 15], strides = [1, 1, 1]} : vector<1x4x16xf32> to vector<1x1x15xf32>
    %20 = vector.extract_strided_slice %1 {offsets = [2, 0, 0], sizes = [1, 8, 1], strides = [1, 1, 1]} : vector<8x8x1xf32> to vector<1x8x1xf32>
    %21 = vector.shape_cast %20 : vector<1x8x1xf32> to vector<8x1xf32>
    %22 = vector.shape_cast %21 : vector<8x1xf32> to vector<1x8x1xf32>
    %23 = vector.broadcast %22 : vector<1x8x1xf32> to vector<1x8x15xf32>
    %24 = vector.broadcast %19 : vector<1x1x15xf32> to vector<1x8x15xf32>
    %25 = arith.mulf %23, %24 : vector<1x8x15xf32>
    %26 = arith.addf %18, %25 : vector<1x8x15xf32>
    %27 = vector.extract_strided_slice %0 {offsets = [0, 3, 0], sizes = [1, 1, 15], strides = [1, 1, 1]} : vector<1x4x16xf32> to vector<1x1x15xf32>
    %28 = vector.extract_strided_slice %1 {offsets = [3, 0, 0], sizes = [1, 8, 1], strides = [1, 1, 1]} : vector<8x8x1xf32> to vector<1x8x1xf32>
    %29 = vector.shape_cast %28 : vector<1x8x1xf32> to vector<8x1xf32>
    %30 = vector.shape_cast %29 : vector<8x1xf32> to vector<1x8x1xf32>
    %31 = vector.broadcast %30 : vector<1x8x1xf32> to vector<1x8x15xf32>
    %32 = vector.broadcast %27 : vector<1x1x15xf32> to vector<1x8x15xf32>
    %33 = arith.mulf %31, %32 : vector<1x8x15xf32>
    %34 = arith.addf %26, %33 : vector<1x8x15xf32>
    %35 = vector.extract_strided_slice %0 {offsets = [0, 0, 1], sizes = [1, 1, 15], strides = [1, 1, 1]} : vector<1x4x16xf32> to vector<1x1x15xf32>
    %36 = vector.extract_strided_slice %1 {offsets = [4, 0, 0], sizes = [1, 8, 1], strides = [1, 1, 1]} : vector<8x8x1xf32> to vector<1x8x1xf32>
    %37 = vector.shape_cast %36 : vector<1x8x1xf32> to vector<8x1xf32>
    %38 = vector.shape_cast %37 : vector<8x1xf32> to vector<1x8x1xf32>
    %39 = vector.broadcast %38 : vector<1x8x1xf32> to vector<1x8x15xf32>
    %40 = vector.broadcast %35 : vector<1x1x15xf32> to vector<1x8x15xf32>
    %41 = arith.mulf %39, %40 : vector<1x8x15xf32>
    %42 = arith.addf %34, %41 : vector<1x8x15xf32>
    %43 = vector.extract_strided_slice %0 {offsets = [0, 1, 1], sizes = [1, 1, 15], strides = [1, 1, 1]} : vector<1x4x16xf32> to vector<1x1x15xf32>
    %44 = vector.extract_strided_slice %1 {offsets = [5, 0, 0], sizes = [1, 8, 1], strides = [1, 1, 1]} : vector<8x8x1xf32> to vector<1x8x1xf32>
    %45 = vector.shape_cast %44 : vector<1x8x1xf32> to vector<8x1xf32>
    %46 = vector.shape_cast %45 : vector<8x1xf32> to vector<1x8x1xf32>
    %47 = vector.broadcast %46 : vector<1x8x1xf32> to vector<1x8x15xf32>
    %48 = vector.broadcast %43 : vector<1x1x15xf32> to vector<1x8x15xf32>
    %49 = arith.mulf %47, %48 : vector<1x8x15xf32>
    %50 = arith.addf %42, %49 : vector<1x8x15xf32>
    %51 = vector.extract_strided_slice %0 {offsets = [0, 2, 1], sizes = [1, 1, 15], strides = [1, 1, 1]} : vector<1x4x16xf32> to vector<1x1x15xf32>
    %52 = vector.extract_strided_slice %1 {offsets = [6, 0, 0], sizes = [1, 8, 1], strides = [1, 1, 1]} : vector<8x8x1xf32> to vector<1x8x1xf32>
    %53 = vector.shape_cast %52 : vector<1x8x1xf32> to vector<8x1xf32>
    %54 = vector.shape_cast %53 : vector<8x1xf32> to vector<1x8x1xf32>
    %55 = vector.broadcast %54 : vector<1x8x1xf32> to vector<1x8x15xf32>
    %56 = vector.broadcast %51 : vector<1x1x15xf32> to vector<1x8x15xf32>
    %57 = arith.mulf %55, %56 : vector<1x8x15xf32>
    %58 = arith.addf %50, %57 : vector<1x8x15xf32>
    %59 = vector.extract_strided_slice %0 {offsets = [0, 3, 1], sizes = [1, 1, 15], strides = [1, 1, 1]} : vector<1x4x16xf32> to vector<1x1x15xf32>
    %60 = vector.extract_strided_slice %1 {offsets = [7, 0, 0], sizes = [1, 8, 1], strides = [1, 1, 1]} : vector<8x8x1xf32> to vector<1x8x1xf32>
    %61 = vector.shape_cast %60 : vector<1x8x1xf32> to vector<8x1xf32>
    %62 = vector.shape_cast %61 : vector<8x1xf32> to vector<1x8x1xf32>
    %63 = vector.broadcast %62 : vector<1x8x1xf32> to vector<1x8x15xf32>
    %64 = vector.broadcast %59 : vector<1x1x15xf32> to vector<1x8x15xf32>
    %65 = arith.mulf %63, %64 : vector<1x8x15xf32>
    %66 = arith.addf %58, %65 : vector<1x8x15xf32>
    %cst_5 = arith.constant dense<0.000000e+00> : vector<8x15xf32>
    %67 = vector.multi_reduction <add>, %66, %cst_5 [0] : vector<1x8x15xf32> to vector<8x15xf32>
    %68 = arith.mulf %66, %66 : vector<1x8x15xf32>
    %cst_6 = arith.constant dense<0.000000e+00> : vector<8x15xf32>
    %69 = vector.multi_reduction <add>, %68, %cst_6 [0] : vector<1x8x15xf32> to vector<8x15xf32>
    %cst_7 = arith.constant dense<0.000000e+00> : vector<8xf32>
    %70 = vector.multi_reduction <add>, %67, %cst_7 [1] : vector<8x15xf32> to vector<8xf32>
    %71 = vector.shape_cast %70 : vector<8xf32> to vector<8x1xf32>
    %cst_8 = arith.constant dense<0.000000e+00> : vector<8xf32>
    %72 = vector.multi_reduction <add>, %69, %cst_8 [1] : vector<8x15xf32> to vector<8xf32>
    %73 = vector.shape_cast %72 : vector<8xf32> to vector<8x1xf32>
    %74 = tpu.concatenate %71, %73 in 1 : vector<8x1xf32>, vector<8x1xf32> -> vector<8x2xf32>
    %75 = vector.shape_cast %74 : vector<8x2xf32> to vector<1x8x2xf32>
    %c0_9 = arith.constant 0 : index
    %c0_10 = arith.constant 0 : index
    %c0_11 = arith.constant 0 : index
    %76 = vector.load %arg3[%c0_9, %c0_10, %c0_11] : memref<1x8x2xf32, #tpu.memory_space<vmem>>, vector<1x8x2xf32>
    tpu.vector_store %arg3[%c0_9, %c0_10, %c0_11], %75 {strides = array<i32>} : memref<1x8x2xf32, #tpu.memory_space<vmem>>, vector<1x8x2xf32>,
    return
  }
  func.func @transform_0(%arg0: i32) -> (i32, i32, i32) {
    %c0_i32 = arith.constant 0 : i32
    %c0_i32_0 = arith.constant 0 : i32
    %c0_i32_1 = arith.constant 0 : i32
    return %arg0, %c0_i32, %c0_i32_0 : i32, i32, i32
  }
  func.func @transform_1(%arg0: i32) -> (i32, i32, i32) {
    %c0_i32 = arith.constant 0 : i32
    %c0_i32_0 = arith.constant 0 : i32
    %c0_i32_1 = arith.constant 0 : i32
    %c0_i32_2 = arith.constant 0 : i32
    return %c0_i32, %c0_i32_0, %c0_i32_1 : i32, i32, i32
  }
  func.func @transform_2(%arg0: i32) -> (i32, i32, i32) {
    %c0_i32 = arith.constant 0 : i32
    %c0_i32_0 = arith.constant 0 : i32
    %c0_i32_1 = arith.constant 0 : i32
    return %arg0, %c0_i32, %c0_i32_0 : i32, i32, i32
  }
}

</mosaic_0001>

<llo_original>
// kernel: tpu_custom_call.1
$region0: #{tpu_custom_call.1}
  #allocation0 [shape = 'u32[]', space=smem, size = 0x4, offset = 0x4, fixed_abs, tag = 'smem constant byte address 0x4 - core index']
  #allocation1 [shape = 'u32[144,128]{1,0:T(1,128)}', space=vmem, size = 0x12000, scoped, tag = 'internal scratch']
  %s0 = inlined_call_operand.vmem [shape: f32[2,4,16], index: 0, kind: input, shape index: {}]
  %s1 = inlined_call_operand.vmem [shape: f32[8,8,1], index: 1, kind: input, shape index: {}]
  %s2 = inlined_call_operand.vmem [shape: f32[2,8,2], index: 2, kind: output, shape index: {}]
  %s3 = sld [smem:[#allocation0]]
  $region41: #{tpu_custom_call.1} parent=0
    _
  %s5 = ssub.s32 1, %s3
  %s6 = scalar_select 0, %s5, %s3
  loop: start=0, step=1, limit=4
  $region2: #{tpu_custom_call.1} parent=0 // loop_pre_header
    _
  $region3: #{tpu_custom_call.1} parent=0 // loop_header
    %s8 = sphi 0, %s12
    %p9 = scmp.ge.s32.totalorder %s8, 4
    %s18 = sphi 0, %s20
    %s21 = sphi 0, %s18
    %s22 = sphi 0, %s21
    %s38 = sphi 0, %s22
    %s42 = sphi 0, %s42
    %s44 = sphi 0, %s42
    %s45 = sphi 0, %s44
    %s59 = sphi 0, %s45
    %s65 = sphi 0, %s67
    %s68 = sphi 0, %s65
    %s69 = sphi 0, %s68
    %s85 = sphi 0, %s69
  $region4: #{tpu_custom_call.1} parent=0 // loop_header_branch
    %11 = sbr.rel (%p9) target = $region8
  $region5: #{tpu_custom_call.1} parent=0 // loop_body
    %s13 = ssub.s32 %s8, 1
    %s14 = ssub.s32 %s8, 2
    %s15 = sadd.s32 %s8, 1
    %s16 = ssub.s32 %s8, %s15
    %p17 = scmp.eq.s32.totalorder %s16, 0
    %s19 = sadd.s32 %s18, 1
    %s20 = scalar_select %p17, %s18, %s19
    %p23 = pneg %p17
    %p24 = scmp.eq.s32.totalorder %s8, 1
    %p25 = por %p23, %p24
    %p26 = scmp.ne.s32.totalorder %s18, %s21
    %p27 = scmp.eq.s32.totalorder %s8, 0
    %p28 = por %p26, %p27
    %p29 = scmp.ne.s32.totalorder %s18, %s21
    %p30 = scmp.eq.s32.totalorder %s13, 1
    %p31 = por %p29, %p30
    %p32 = scmp.ne.s32.totalorder %s21, %s22
    %p33 = scmp.eq.s32.totalorder %s13, 0
    %p34 = por %p32, %p33
    %p35 = scmp.ne.s32.totalorder %s21, %s22
    %p36 = scmp.eq.s32.totalorder %s14, 1
    %p37 = por %p35, %p36
    %p39 = scmp.ne.s32.totalorder %s22, %s38
    %p40 = scmp.eq.s32.totalorder %s14, 0
    %p41 = por %p39, %p40
    %s43 = sadd.s32 %s42, 1
    %p46 = scmp.eq.s32.totalorder %s8, 1
    %p47 = scmp.ne.s32.totalorder %s42, %s44
    %p48 = scmp.eq.s32.totalorder %s8, 0
    %p49 = por %p47, %p48
    %p50 = scmp.ne.s32.totalorder %s42, %s44
    %p51 = scmp.eq.s32.totalorder %s13, 1
    %p52 = por %p50, %p51
    %p53 = scmp.ne.s32.totalorder %s44, %s45
    %p54 = scmp.eq.s32.totalorder %s13, 0
    %p55 = por %p53, %p54
    %p56 = scmp.ne.s32.totalorder %s44, %s45
    %p57 = scmp.eq.s32.totalorder %s14, 1
    %p58 = por %p56, %p57
    %p60 = scmp.ne.s32.totalorder %s45, %s59
    %p61 = scmp.eq.s32.totalorder %s14, 0
    %p62 = por %p60, %p61
    %s63 = ssub.s32 %s8, %s15
    %p64 = scmp.eq.s32.totalorder %s63, 0
    %s66 = sadd.s32 %s65, 1
    %s67 = scalar_select %p64, %s65, %s66
    %p70 = pneg %p64
    %p71 = scmp.eq.s32.totalorder %s8, 1
    %p72 = por %p70, %p71
    %p73 = scmp.ne.s32.totalorder %s65, %s68
    %p74 = scmp.eq.s32.totalorder %s8, 0
    %p75 = por %p73, %p74
    %p76 = scmp.ne.s32.totalorder %s65, %s68
    %p77 = scmp.eq.s32.totalorder %s13, 1
    %p78 = por %p76, %p77
    %p79 = scmp.ne.s32.totalorder %s68, %s69
    %p80 = scmp.eq.s32.totalorder %s13, 0
    %p81 = por %p79, %p80
    %p82 = scmp.ne.s32.totalorder %s68, %s69
    %p83 = scmp.eq.s32.totalorder %s14, 1
    %p84 = por %p82, %p83
    %p86 = scmp.ne.s32.totalorder %s69, %s85
    %p87 = scmp.eq.s32.totalorder %s14, 0
    %p88 = por %p86, %p87
    %p89 = scmp.le.s32.totalorder 1, %s8
    %p90 = scmp.lt.s32.totalorder %s8, 3
    %p91 = pnand %p89, %p90
    %p92 = pneg %p91
    // Predicated region
    $region9: #{tpu_custom_call.1} parent=5 // pred_check
      _
    $region10: #{tpu_custom_call.1} parent=5 // pred_check_branch
      %94 = sbr.rel (%p91) target = $region12
    $region11: #{tpu_custom_call.1} parent=5 // pred_region
      %s95 = ssub.s32 %s8, 1
      // Predicated region
      $region13: #{tpu_custom_call.1} parent=11 // pred_check
        %p96 = pneg %p55
      $region14: #{tpu_custom_call.1} parent=11 // pred_check_branch
        %98 = sbr.rel (%p96) target = $region16
      $region15: #{tpu_custom_call.1} parent=11 // pred_region
        _
      $region16: #{tpu_custom_call.1} parent=11 // pred_fallthru
        _
    $region12: #{tpu_custom_call.1} parent=5 // pred_fallthru
      _
    %p99 = scmp.lt.s32.totalorder %s8, 2
    // Predicated region
    $region17: #{tpu_custom_call.1} parent=5 // pred_check
      %p100 = pneg %p99
    $region18: #{tpu_custom_call.1} parent=5 // pred_check_branch
      %102 = sbr.rel (%p100) target = $region20
    $region19: #{tpu_custom_call.1} parent=5 // pred_region
      // Predicated region
      $region21: #{tpu_custom_call.1} parent=19 // pred_check
        %p103 = pneg %p28
      $region22: #{tpu_custom_call.1} parent=19 // pred_check_branch
        %105 = sbr.rel (%p103) target = $region24
      $region23: #{tpu_custom_call.1} parent=19 // pred_region
        %p106 = scmp.lt.s32.totalorder %s8, 1
        %s107 = scalar_select %p106, %s8, 1
        %s108 = smul.addr %s107, 4
        %s109 = scalar_lea.vmem %s0, %s108
      $region24: #{tpu_custom_call.1} parent=19 // pred_fallthru
        _
    $region20: #{tpu_custom_call.1} parent=5 // pred_fallthru
      _
    %p110 = scmp.le.s32.totalorder 1, %s8
    %p111 = scmp.lt.s32.totalorder %s8, 3
    %p112 = pnand %p110, %p111
    %p113 = pneg %p112
    // Predicated region
    $region25: #{tpu_custom_call.1} parent=5 // pred_check
      _
    $region26: #{tpu_custom_call.1} parent=5 // pred_check_branch
      %115 = sbr.rel (%p112) target = $region28
    $region27: #{tpu_custom_call.1} parent=5 // pred_region
      %s116 = ssub.s32 %s8, 1
      %p117 = scmp.lt.s32.totalorder %s13, 1
      %s118 = scalar_select %p117, %s13, 1
      %s119 = smul.addr %s118, 4
      %s120 = scalar_lea.vmem %s0, %s119
      %p121 = pneg %p34
      %p122 = pneg %p31
      %p123 = pneg %p55
      %p124 = pneg %p52
      %p125 = pneg %p81
      %p126 = pneg %p78
      %p127 = scmp.lt.s32.totalorder %s13, 1
      %s128 = scalar_select %p127, %s13, 1
      %s129 = smul.addr %s128, 8
      %s130 = scalar_lea.vmem %s2, %s129
      %p131 = scmp.lt.s32.totalorder %s13, 1
      %s132 = scalar_select %p131, %s13, 1
      %s133 = smul.addr %s132, 4
      %s134 = scalar_lea.vmem %s0, %s133
      %p135 = scmp.lt.s32.totalorder %s13, 1
      %s136 = scalar_select %p135, %s13, 1
      %s137 = smul.addr %s136, 8
      %s138 = scalar_lea.vmem %s2, %s137
      %v139 = vld [vmem:[%s134] sm:$0xf]
      %v140 = vld [vmem:[%s1] sm:$0xff]
      %v141 = vld [vmem:[%s1 + $0x8] sm:$0xff]
      %v142 = vld [vmem:[%s1 + $0x10] sm:$0xff]
      %v143 = vld [vmem:[%s1 + $0x18] sm:$0xff]
      %v144 = vld [vmem:[%s1 + $0x20] sm:$0xff]
      %v145 = vld [vmem:[%s1 + $0x28] sm:$0xff]
      %v146 = vld [vmem:[%s1 + $0x30] sm:$0xff]
      %v147 = vld [vmem:[%s1 + $0x38] sm:$0xff]
      %149 = vset.pattern.permute.xlu0 0
      %150 = vperm.xlu0 %149, %v140
      %v151 = vpop.permute.xlu0 %150
      %v153 = vlaneseq
      %v154 = vshrl.u32 %v153, 7
      %v155 = vsub.s32 0, %v154
      %v156 = vrot.slane %v139, %v155
      %v157 = vmul.f32 %v151, %v156
      %v158 = vadd.f32 %v157, 0.0
      %160 = vset.pattern.permute.xlu0 0
      %161 = vperm.xlu0 %160, %v141
      %v162 = vpop.permute.xlu0 %161
      %v164 = vlaneseq
      %v165 = vshrl.u32 %v164, 7
      %v166 = vsub.s32 1, %v165
      %v167 = vrot.slane %v139, %v166
      %v168 = vmul.f32 %v162, %v167
      %v169 = vadd.f32 %v158, %v168
      %171 = vset.pattern.permute.xlu0 0
      %172 = vperm.xlu0 %171, %v142
      %v173 = vpop.permute.xlu0 %172
      %v175 = vlaneseq
      %v176 = vshrl.u32 %v175, 7
      %v177 = vsub.s32 2, %v176
      %v178 = vrot.slane %v139, %v177
      %v179 = vmul.f32 %v173, %v178
      %v180 = vadd.f32 %v169, %v179
      %182 = vset.pattern.permute.xlu0 0
      %183 = vperm.xlu0 %182, %v143
      %v184 = vpop.permute.xlu0 %183
      %v186 = vlaneseq
      %v187 = vshrl.u32 %v186, 7
      %v188 = vsub.s32 3, %v187
      %v189 = vrot.slane %v139, %v188
      %v190 = vmul.f32 %v184, %v189
      %v191 = vadd.f32 %v180, %v190
      %193 = vset.pattern.permute.xlu0 0
      %194 = vperm.xlu0 %193, %v144
      %v195 = vpop.permute.xlu0 %194
      %v197 = vmul.f32 %v195, %v156
      %199 = vrot.lane.b32.xlu0 %v197, 127
      %v200 = vpop.permute.xlu0 %199
      %v202 = vadd.f32 %v191, %v200
      %204 = vset.pattern.permute.xlu0 0
      %205 = vperm.xlu0 %204, %v145
      %v206 = vpop.permute.xlu0 %205
      %v208 = vmul.f32 %v206, %v167
      %210 = vrot.lane.b32.xlu0 %v208, 127
      %v211 = vpop.permute.xlu0 %210
      %v213 = vadd.f32 %v202, %v211
      %215 = vset.pattern.permute.xlu0 0
      %216 = vperm.xlu0 %215, %v146
      %v217 = vpop.permute.xlu0 %216
      %v219 = vmul.f32 %v217, %v178
      %221 = vrot.lane.b32.xlu0 %v219, 127
      %v222 = vpop.permute.xlu0 %221
      %v224 = vadd.f32 %v213, %v222
      %226 = vset.pattern.permute.xlu0 0
      %227 = vperm.xlu0 %226, %v147
      %v228 = vpop.permute.xlu0 %227
      %v230 = vmul.f32 %v228, %v189
      %232 = vrot.lane.b32.xlu0 %v230, 127
      %v233 = vpop.permute.xlu0 %232
      %v235 = vadd.f32 %v224, %v233
      %v236 = vadd.f32 %v235, 0.0
      %v237 = vmul.f32 %v235, %v235
      %v238 = vadd.f32 %v237, 0.0
      %vm239 = vcmask 121856
      %v240 = vsel %vm239, %v236, 0.0
      %241 = vadd.xlane.f32.xlu0 %v240
      %v242 = vpop.xlane.xlu0 %241
      %v243 = vsel %vm239, %v238, 0.0
      %244 = vadd.xlane.f32.xlu0 %v243
      %v245 = vpop.xlane.xlu0 %244
      %vm246 = vcmask 7168
      %v247 = vsel %vm246, %v242, %v245
      %vm248 = vcmask 15360
      %249 = vst.msk [vmem:[%s138] sm:$0xff] %vm248, %v247
      %p250 = scmp.lt.s32.totalorder %s13, 1
      %s251 = scalar_select %p250, %s13, 1
      %s252 = smul.addr %s251, 8
      %s253 = scalar_lea.vmem %s2, %s252
      // Predicated region
      $region29: #{tpu_custom_call.1} parent=27 // pred_check
        %p254 = pneg %p78
      $region30: #{tpu_custom_call.1} parent=27 // pred_check_branch
        %256 = sbr.rel (%p254) target = $region32
      $region31: #{tpu_custom_call.1} parent=27 // pred_region
        _
      $region32: #{tpu_custom_call.1} parent=27 // pred_fallthru
        _
    $region28: #{tpu_custom_call.1} parent=5 // pred_fallthru
      _
    %p257 = scmp.le.s32.totalorder 2, %s8
    // Predicated region
    $region33: #{tpu_custom_call.1} parent=5 // pred_check
      %p258 = pneg %p257
    $region34: #{tpu_custom_call.1} parent=5 // pred_check_branch
      %260 = sbr.rel (%p258) target = $region36
    $region35: #{tpu_custom_call.1} parent=5 // pred_region
      %s261 = ssub.s32 %s8, 2
      // Predicated region
      $region37: #{tpu_custom_call.1} parent=35 // pred_check
        %p262 = pneg %p84
      $region38: #{tpu_custom_call.1} parent=35 // pred_check_branch
        %264 = sbr.rel (%p262) target = $region40
      $region39: #{tpu_custom_call.1} parent=35 // pred_region
        %p265 = scmp.lt.s32.totalorder %s14, 1
        %s266 = scalar_select %p265, %s14, 1
        %s267 = smul.addr %s266, 8
        %s268 = scalar_lea.vmem %s2, %s267
      $region40: #{tpu_custom_call.1} parent=35 // pred_fallthru
        _
    $region36: #{tpu_custom_call.1} parent=5 // pred_fallthru
      _
  $region6: #{tpu_custom_call.1} parent=0 // loop_footer
    %s12 = sadd.s32 1, %s8
  $region7: #{tpu_custom_call.1} parent=0 // loop_footer_branch
    %7 = sbr.rel target = $region3
  $region8: #{tpu_custom_call.1} parent=0 // loop_exit
    _

</llo_original>
